<compile_context>
chip_gen: v6e
topology: v6e:2x2x1
jax: 0.10.0
libtpu: 0.0.40
codegen_flags: <defaults>
</compile_context>

<pallas_src>
import functools

import jax
import jax.numpy as jnp
from jax.experimental import pallas as pl
from jax.experimental.pallas import tpu as pltpu


# --------------------------------------------------------------------------- kernels


def _pool_se_kernel(x_ref, w1t_ref, b1t_ref, w2_ref, b2_ref, y_ref, acc_ref, *, inv_hw):
    """Spatial-sum accumulation + squeeze/excite finalize (runs once per batch).

    x_ref:   (C, TILE_HW)  current spatial tile of batch b
    w1t_ref: (C, C_sq)     squeeze weight, pre-transposed
    b1t_ref: (1, C_sq)
    w2_ref:  (C, C_sq)     excite weight
    b2_ref:  (C, 1)
    y_ref:   (C, 1)        per-channel attention for batch b (written on last tile)
    acc_ref: (C, 1) f32    running spatial sum (scratch, persists across tile axis)
    """
    t = pl.program_id(1)

    @pl.when(t == 0)
    def _init():
        acc_ref[...] = jnp.zeros_like(acc_ref)

    # Lane (XLU) reduction of this tile -- effectively free in a mem-bound kernel.
    x = x_ref[...].astype(jnp.float32)                      # (C, TILE_HW)
    acc_ref[...] += jnp.sum(x, axis=-1, keepdims=True)      # (C, 1)

    @pl.when(t == pl.num_programs(1) - 1)
    def _finalize():
        pooled = acc_ref[...] * inv_hw                      # (C, 1)  == AdaptiveAvgPool2d(1)
        # Squeeze (C -> C_sq): VPU broadcast-multiply + sublane reduce (no MXU round-trip).
        h = jnp.sum(w1t_ref[...] * pooled, axis=0, keepdims=True) + b1t_ref[...]  # (1, C_sq)
        h = jnp.maximum(h, 0.0)                             # ReLU
        # Excite (C_sq -> C): VPU broadcast-multiply + lane reduce.
        z = jnp.sum(w2_ref[...] * h, axis=1, keepdims=True) + b2_ref[...]          # (C, 1)
        y_ref[...] = jax.nn.sigmoid(z).astype(y_ref.dtype)


def _scale_kernel(x_ref, y_ref, o_ref):
    """out_tile = x_tile * y[b]  (per-channel scale, broadcast over the lane axis)."""
    o_ref[...] = (x_ref[...].astype(jnp.float32) * y_ref[...]).astype(o_ref.dtype)


# --------------------------------------------------------------------------- wrapper


def _pick_tile_hw(hw, c, dtype_bytes, max_tile_bytes=4 * 1024 * 1024):
    """Largest lane-dense (multiple-of-128) divisor of hw with C*tile*bytes <= budget."""
    max_lanes = max(128, max_tile_bytes // max(1, c * dtype_bytes))
    if hw <= max_lanes:
        return hw                               # whole spatial extent fits in one tile
    t = (max_lanes // 128) * 128
    while t >= 128:
        if hw % t == 0:
            return t
        t -= 128
    # Ragged spatial size with no 128-multiple divisor: fall back to the full extent.
    # TODO(synk): pad H*W to a multiple of 128 outside the kernel for ragged shapes.
    return hw


def channel_attention(x, w1, b1, w2, b2, *, tile_hw=None):
    """x: (B, C, H, W). w1: (C_sq, C), b1: (C_sq, 1), w2: (C, C_sq), b2: (C, 1)."""
    B, C, H, W = x.shape
    HW = H * W
    C_sq = w1.shape[0]
    in_bytes = jnp.dtype(x.dtype).itemsize

    if tile_hw is None:
        tile_hw = _pick_tile_hw(HW, C, in_bytes)
    assert HW % tile_hw == 0 and (tile_hw % 128 == 0 or tile_hw == HW), (
        "tile_hw must divide H*W and be a multiple of 128 (or the full extent)")
    num_tiles = HW // tile_hw

    x_flat = x.reshape(B, C, HW)
    # Pre-arrange the tiny SE params so in-kernel math is pure broadcast + reduce.
    w1t = w1.T                        # (C, C_sq)
    b1t = b1.reshape(1, C_sq)         # (1, C_sq)

    tile_bytes = C * tile_hw * in_bytes
    vmem_limit = int(min(48 * 2**20, max(8 * 2**20, 6 * tile_bytes)))

    # -------- pass 1: global average pool + squeeze/excite -> y: (B, C, 1) --------
    pool_cost = pl.CostEstimate(
        flops=B * C * HW + 4 * B * C * C_sq,
        transcendentals=B * C,
        bytes_accessed=B * C * HW * in_bytes + B * C * 4 + (2 * C * C_sq + C_sq + C) * 4,
    )
    y = pl.pallas_call(
        functools.partial(_pool_se_kernel, inv_hw=1.0 / HW),
        out_shape=jax.ShapeDtypeStruct((B, C, 1), jnp.float32),
        grid_spec=pltpu.PrefetchScalarGridSpec(
            num_scalar_prefetch=0,
            grid=(B, num_tiles),
            in_specs=[
                pl.BlockSpec((pl.Squeezed(), C, tile_hw), lambda b, t: (b, 0, t)),
                pl.BlockSpec((C, C_sq), lambda b, t: (0, 0)),
                pl.BlockSpec((1, C_sq), lambda b, t: (0, 0)),
                pl.BlockSpec((C, C_sq), lambda b, t: (0, 0)),
                pl.BlockSpec((C, 1), lambda b, t: (0, 0)),
            ],
            out_specs=pl.BlockSpec((pl.Squeezed(), C, 1), lambda b, t: (b, 0, 0)),
            scratch_shapes=[pltpu.VMEM((C, 1), jnp.float32)],
        ),
        compiler_params=pltpu.CompilerParams(
            dimension_semantics=("parallel", "arbitrary"),
            vmem_limit_bytes=vmem_limit),
        cost_estimate=pool_cost,
    )(x_flat, w1t, b1t, w2, b2)

    # -------- pass 2: out = x * y (scale-only, fully parallel over B and spatial tiles) --------
    scale_cost = pl.CostEstimate(
        flops=B * C * HW,
        transcendentals=0,
        bytes_accessed=2 * B * C * HW * in_bytes + B * C * 4,
    )
    out_flat = pl.pallas_call(
        _scale_kernel,
        out_shape=jax.ShapeDtypeStruct((B, C, HW), x.dtype),
        grid_spec=pltpu.PrefetchScalarGridSpec(
            num_scalar_prefetch=0,
            grid=(B, num_tiles),
            in_specs=[
                pl.BlockSpec((pl.Squeezed(), C, tile_hw), lambda b, t: (b, 0, t)),
                pl.BlockSpec((pl.Squeezed(), C, 1), lambda b, t: (b, 0, 0)),
            ],
            out_specs=pl.BlockSpec((pl.Squeezed(), C, tile_hw), lambda b, t: (b, 0, t)),
        ),
        compiler_params=pltpu.CompilerParams(
            dimension_semantics=("parallel", "parallel"),
            vmem_limit_bytes=vmem_limit),
        cost_estimate=scale_cost,
    )(x_flat, y)

    return out_flat.reshape(B, C, H, W)


# --------------------------------------------------------------------------- reference


def reference(x, w1, b1, w2, b2):
    pooled = jnp.mean(x, axis=(2, 3))                       # (B, C)
    h = jnp.maximum(pooled @ w1.T + b1[:, 0], 0.0)          # (B, C_sq)
    y = jax.nn.sigmoid(h @ w2.T + b2[:, 0])                 # (B, C)
    return x * y[:, :, None, None]


if __name__ == "__main__":
    B, C, H, W = 2, 16, 16, 16
    squeeze_factor = 8
    C_sq = C // squeeze_factor

    key = jax.random.PRNGKey(0)
    kx, k1, k2, k3, k4 = jax.random.split(key, 5)

    x = jax.random.normal(kx, (B, C, H, W), dtype=jnp.float32)
    # Deterministic parameter init (1x1 conv weights squeezed to 2-D matmuls).
    w1 = jax.random.normal(k1, (C_sq, C), dtype=jnp.float32) * 0.1
    b1 = jax.random.normal(k2, (C_sq, 1), dtype=jnp.float32) * 0.1
    w2 = jax.random.normal(k3, (C, C_sq), dtype=jnp.float32) * 0.1
    b2 = jax.random.normal(k4, (C, 1), dtype=jnp.float32) * 0.1

    ref = reference(x, w1, b1, w2, b2)

    # Multi-tile path (two 128-lane spatial tiles per batch): exercises the
    # reduction pipeline and the pl.when init/finalize accumulator pattern.
    out_tiled = channel_attention(x, w1, b1, w2, b2, tile_hw=128)
    jax.block_until_ready(out_tiled)
    assert jnp.allclose(out_tiled, ref, atol=1e-5, rtol=1e-5), "tiled path mismatch"

    # Auto tile selection (single full-HW tile at this small size).
    out_auto = channel_attention(x, w1, b1, w2, b2)
    jax.block_until_ready(out_auto)
    assert jnp.allclose(out_auto, ref, atol=1e-5, rtol=1e-5), "auto-tile path mismatch"

    print("KERNEL_OK")
</pallas_src>

<mosaic_0001>
module attributes {stable_mosaic.version = 11 : i64} {
  func.func @_pool_se_kernel(%arg0: i32, %arg1: i32, %arg2: memref<1x16x128xf32, #tpu.memory_space<vmem>>, %arg3: memref<16x2xf32, #tpu.memory_space<vmem>>, %arg4: memref<1x2xf32, #tpu.memory_space<vmem>>, %arg5: memref<16x2xf32, #tpu.memory_space<vmem>>, %arg6: memref<16x1xf32, #tpu.memory_space<vmem>>, %arg7: memref<1x16x1xf32, #tpu.memory_space<vmem>>, %arg8: memref<16x1xf32, #tpu.memory_space<vmem>>) attributes {dimension_semantics = [#tpu.dimension_semantics<parallel>, #tpu.dimension_semantics<arbitrary>], iteration_bounds = array<i64: 2, 2>, scalar_prefetch = 0 : i64, scratch_operands = 1 : i64, tpu.core_type = #tpu.core_type<tc>, window_params = [{transform_indices = @transform_0, window_bounds = array<i64: 1, 16, 128>}, {pipeline_mode = #tpu.pipeline_mode<synchronous>, transform_indices = @transform_1, window_bounds = array<i64: 16, 2>}, {pipeline_mode = #tpu.pipeline_mode<synchronous>, transform_indices = @transform_2, window_bounds = array<i64: 1, 2>}, {pipeline_mode = #tpu.pipeline_mode<synchronous>, transform_indices = @transform_3, window_bounds = array<i64: 16, 2>}, {pipeline_mode = #tpu.pipeline_mode<synchronous>, transform_indices = @transform_4, window_bounds = array<i64: 16, 1>}, {transform_indices = @transform_5, window_bounds = array<i64: 1, 16, 1>}]} {
    %c0_i32 = arith.constant 0 : i32
    %0 = arith.cmpi eq, %arg1, %c0_i32 : i32
    %1 = arith.extui %0 : i1 to i32
    %c0_i32_0 = arith.constant 0 : i32
    %2 = arith.cmpi ne, %1, %c0_i32_0 : i32
    scf.if %2 {
      %cst_8 = arith.constant 0.000000e+00 : f32
      %13 = vector.broadcast %cst_8 : f32 to vector<16x1xf32>
      %c0_9 = arith.constant 0 : index
      %c0_10 = arith.constant 0 : index
      %14 = vector.load %arg8[%c0_9, %c0_10] : memref<16x1xf32, #tpu.memory_space<vmem>>, vector<16x1xf32>
      tpu.vector_store %arg8[%c0_9, %c0_10], %13 {strides = array<i32>} : memref<16x1xf32, #tpu.memory_space<vmem>>, vector<16x1xf32>,
    } else {
    }
    %c0 = arith.constant 0 : index
    %c0_1 = arith.constant 0 : index
    %c0_2 = arith.constant 0 : index
    %3 = vector.load %arg2[%c0, %c0_1, %c0_2] : memref<1x16x128xf32, #tpu.memory_space<vmem>>, vector<1x16x128xf32>
    %4 = vector.shape_cast %3 : vector<1x16x128xf32> to vector<16x128xf32>
    %c0_3 = arith.constant 0 : index
    %c0_4 = arith.constant 0 : index
    %5 = vector.load %arg8[%c0_3, %c0_4] : memref<16x1xf32, #tpu.memory_space<vmem>>, vector<16x1xf32>
    %cst = arith.constant dense<0.000000e+00> : vector<16xf32>
    %6 = vector.multi_reduction <add>, %4, %cst [1] : vector<16x128xf32> to vector<16xf32>
    %7 = vector.shape_cast %6 : vector<16xf32> to vector<16x1xf32>
    %8 = arith.addf %5, %7 : vector<16x1xf32>
    %c0_5 = arith.constant 0 : index
    %c0_6 = arith.constant 0 : index
    %9 = vector.load %arg8[%c0_5, %c0_6] : memref<16x1xf32, #tpu.memory_space<vmem>>, vector<16x1xf32>
    tpu.vector_store %arg8[%c0_5, %c0_6], %8 {strides = array<i32>} : memref<16x1xf32, #tpu.memory_space<vmem>>, vector<16x1xf32>,
    %c1_i32 = arith.constant 1 : i32
    %10 = arith.cmpi eq, %arg1, %c1_i32 : i32
    %11 = arith.extui %10 : i1 to i32
    %c0_i32_7 = arith.constant 0 : i32
    %12 = arith.cmpi ne, %11, %c0_i32_7 : i32
    scf.if %12 {
      %c0_8 = arith.constant 0 : index
      %c0_9 = arith.constant 0 : index
      %13 = vector.load %arg8[%c0_8, %c0_9] : memref<16x1xf32, #tpu.memory_space<vmem>>, vector<16x1xf32>
      %cst_10 = arith.constant 3.906250e-03 : f32
      %14 = vector.broadcast %cst_10 : f32 to vector<16x1xf32>
      %15 = arith.mulf %13, %14 : vector<16x1xf32>
      %c0_11 = arith.constant 0 : index
      %c0_12 = arith.constant 0 : index
      %16 = vector.load %arg3[%c0_11, %c0_12] : memref<16x2xf32, #tpu.memory_space<vmem>>, vector<16x2xf32>
      %17 = vector.broadcast %15 : vector<16x1xf32> to vector<16x2xf32>
      %18 = arith.mulf %16, %17 : vector<16x2xf32>
      %cst_13 = arith.constant dense<0.000000e+00> : vector<2xf32>
      %19 = vector.multi_reduction <add>, %18, %cst_13 [0] : vector<16x2xf32> to vector<2xf32>
      %20 = vector.shape_cast %19 : vector<2xf32> to vector<1x2xf32>
      %c0_14 = arith.constant 0 : index
      %c0_15 = arith.constant 0 : index
      %21 = vector.load %arg4[%c0_14, %c0_15] : memref<1x2xf32, #tpu.memory_space<vmem>>, vector<1x2xf32>
      %22 = arith.addf %20, %21 : vector<1x2xf32>
      %cst_16 = arith.constant 0.000000e+00 : f32
      %23 = vector.broadcast %cst_16 : f32 to vector<1x2xf32>
      %24 = arith.maximumf %22, %23 : vector<1x2xf32>
      %c0_17 = arith.constant 0 : index
      %c0_18 = arith.constant 0 : index
      %25 = vector.load %arg5[%c0_17, %c0_18] : memref<16x2xf32, #tpu.memory_space<vmem>>, vector<16x2xf32>
      %26 = vector.broadcast %24 : vector<1x2xf32> to vector<16x2xf32>
      %27 = arith.mulf %25, %26 : vector<16x2xf32>
      %cst_19 = arith.constant dense<0.000000e+00> : vector<16xf32>
      %28 = vector.multi_reduction <add>, %27, %cst_19 [1] : vector<16x2xf32> to vector<16xf32>
      %29 = vector.shape_cast %28 : vector<16xf32> to vector<16x1xf32>
      %c0_20 = arith.constant 0 : index
      %c0_21 = arith.constant 0 : index
      %30 = vector.load %arg6[%c0_20, %c0_21] : memref<16x1xf32, #tpu.memory_space<vmem>>, vector<16x1xf32>
      %31 = arith.addf %29, %30 : vector<16x1xf32>
      %32 = arith.negf %31 : vector<16x1xf32>
      %33 = math.exp %32 : vector<16x1xf32>
      %cst_22 = arith.constant 1.000000e+00 : f32
      %34 = vector.broadcast %cst_22 : f32 to vector<16x1xf32>
      %35 = arith.addf %34, %33 : vector<16x1xf32>
      %36 = arith.divf %34, %35 : vector<16x1xf32>
      %c0_23 = arith.constant 0 : index
      %c0_24 = arith.constant 0 : index
      %c0_25 = arith.constant 0 : index
      %37 = vector.load %arg7[%c0_23, %c0_24, %c0_25] : memref<1x16x1xf32, #tpu.memory_space<vmem>>, vector<1x16x1xf32>
      %38 = vector.shape_cast %37 : vector<1x16x1xf32> to vector<16x1xf32>
      %39 = vector.shape_cast %36 : vector<16x1xf32> to vector<1x16x1xf32>
      tpu.vector_store %arg7[%c0_23, %c0_24, %c0_25], %39 {strides = array<i32>} : memref<1x16x1xf32, #tpu.memory_space<vmem>>, vector<1x16x1xf32>,
    } else {
    }
    return
  }
  func.func @transform_0(%arg0: i32, %arg1: i32) -> (i32, i32, i32) {
    %c0_i32 = arith.constant 0 : i32
    %c0_i32_0 = arith.constant 0 : i32
    return %arg0, %c0_i32, %arg1 : i32, i32, i32
  }
  func.func @transform_1(%arg0: i32, %arg1: i32) -> (i32, i32) {
    %c0_i32 = arith.constant 0 : i32
    %c0_i32_0 = arith.constant 0 : i32
    %c0_i32_1 = arith.constant 0 : i32
    return %c0_i32, %c0_i32_0 : i32, i32
  }
  func.func @transform_2(%arg0: i32, %arg1: i32) -> (i32, i32) {
    %c0_i32 = arith.constant 0 : i32
    %c0_i32_0 = arith.constant 0 : i32
    %c0_i32_1 = arith.constant 0 : i32
    return %c0_i32, %c0_i32_0 : i32, i32
  }
  func.func @transform_3(%arg0: i32, %arg1: i32) -> (i32, i32) {
    %c0_i32 = arith.constant 0 : i32
    %c0_i32_0 = arith.constant 0 : i32
    %c0_i32_1 = arith.constant 0 : i32
    return %c0_i32, %c0_i32_0 : i32, i32
  }
  func.func @transform_4(%arg0: i32, %arg1: i32) -> (i32, i32) {
    %c0_i32 = arith.constant 0 : i32
    %c0_i32_0 = arith.constant 0 : i32
    %c0_i32_1 = arith.constant 0 : i32
    return %c0_i32, %c0_i32_0 : i32, i32
  }
  func.func @transform_5(%arg0: i32, %arg1: i32) -> (i32, i32, i32) {
    %c0_i32 = arith.constant 0 : i32
    %c0_i32_0 = arith.constant 0 : i32
    %c0_i32_1 = arith.constant 0 : i32
    return %arg0, %c0_i32, %c0_i32_0 : i32, i32, i32
  }
}

</mosaic_0001>

<llo_original>
// kernel: tpu_custom_call.1
$region0: #{tpu_custom_call.1}
  #allocation0 [shape = 'u32[]', space=smem, size = 0x4, offset = 0x4, fixed_abs, tag = 'smem constant byte address 0x4 - core index']
  #allocation1 [shape = 'u32[144,128]{1,0:T(1,128)}', space=vmem, size = 0x12000, scoped, tag = 'internal scratch']
  #allocation2 [shape = 'f32[16,1]{1,0:T(8,128)}', space=vmem, size = 0x2000, scoped, tag = 'scratch operand']
  %s0 = inlined_call_operand.hbm [shape: f32[2,16,256], index: 0, kind: input, shape index: {}]
  %s1 = inlined_call_operand.vmem [shape: f32[16,2], index: 1, kind: input, shape index: {}]
  %s2 = inlined_call_operand.vmem [shape: f32[1,2], index: 2, kind: input, shape index: {}]
  %s3 = inlined_call_operand.vmem [shape: f32[16,2], index: 3, kind: input, shape index: {}]
  %s4 = inlined_call_operand.vmem [shape: f32[16,1], index: 4, kind: input, shape index: {}]
  %s5 = inlined_call_operand.vmem [shape: f32[2,16,1], index: 5, kind: output, shape index: {}]
  %s6 = sld [smem:[#allocation0]]
  $region65: #{tpu_custom_call.1} parent=0
    _
  %s8 = ssub.s32 1, %s6
  %s9 = scalar_select 0, %s8, %s6
  $region1: #{tpu_custom_call.1} parent=0
    #allocation3 [shape = 'u8[16384]{0}', space=vmem, size = 0x4000, scoped, tag = 'input window, operand 0']
    #allocation4 [shape = 's32[2]{0}', space=sflag, size = 0x8, scoped, tag = 'scoped memory for tpu_custom_call.1']
    %10 = vsyncpa [#allocation4], 0
    %s11 = scalar_lea.sflag [#allocation4], 1
    %12 = vsyncpa %s11, 0
    loop: start=0, step=1, limit=6
    $region2: #{tpu_custom_call.1} parent=1 // loop_pre_header
      _
    $region3: #{tpu_custom_call.1} parent=1 // loop_header
      %s14 = sphi 0, %s18
      %p15 = scmp.ge.s32.totalorder %s14, 6
      %s21 = sphi 0, %s33
      %s22 = sphi 0, %s29
      %s23 = sphi 0, %s21
      %s24 = sphi 0, %s22
      %s25 = sphi 0, %s23
      %s26 = sphi 0, %s24
      %s38 = sphi 0, %s40
      %s41 = sphi 0, %s38
      %s42 = sphi 0, %s41
      %s58 = sphi 0, %s42
      %s62 = sphi 0, %s62
      %s64 = sphi 0, %s62
      %s65 = sphi 0, %s64
      %s79 = sphi 0, %s65
      %s83 = sphi 0, %s83
      %s85 = sphi 0, %s83
      %s86 = sphi 0, %s85
      %s100 = sphi 0, %s86
      %s104 = sphi 0, %s104
      %s106 = sphi 0, %s104
      %s107 = sphi 0, %s106
      %s121 = sphi 0, %s107
      %s125 = sphi 0, %s125
      %s127 = sphi 0, %s125
      %s128 = sphi 0, %s127
      %s142 = sphi 0, %s128
      %s148 = sphi 0, %s150
      %s151 = sphi 0, %s148
      %s152 = sphi 0, %s151
      %s168 = sphi 0, %s152
    $region4: #{tpu_custom_call.1} parent=1 // loop_header_branch
      %17 = sbr.rel (%p15) target = $region8
    $region5: #{tpu_custom_call.1} parent=1 // loop_body
      %s19 = ssub.s32 %s14, 1
      %s20 = ssub.s32 %s14, 2
      %s27 = sadd.s32 1, %s22
      %p28 = scmp.ge.s32.totalorder %s27, 2
      %s29 = scalar_select %p28, 0, %s27
      %s30 = sadd.s32 1, %s21
      %s31 = scalar_select %p28, %s30, %s21
      %p32 = scmp.ge.s32.totalorder %s31, 2
      %s33 = scalar_select %p32, 0, %s31
      %s34 = ssub.s32 %s21, %s33
      %s35 = ssub.s32 %s22, %s29
      %s36 = sor.u32 %s34, %s35
      %p37 = scmp.eq.s32.totalorder %s36, 0
      %s39 = sadd.s32 %s38, 1
      %s40 = scalar_select %p37, %s38, %s39
      %p43 = pneg %p37
      %p44 = scmp.eq.s32.totalorder %s14, 3
      %p45 = por %p43, %p44
      %p46 = scmp.ne.s32.totalorder %s38, %s41
      %p47 = scmp.eq.s32.totalorder %s14, 0
      %p48 = por %p46, %p47
      %p49 = scmp.ne.s32.totalorder %s38, %s41
      %p50 = scmp.eq.s32.totalorder %s19, 3
      %p51 = por %p49, %p50
      %p52 = scmp.ne.s32.totalorder %s41, %s42
      %p53 = scmp.eq.s32.totalorder %s19, 0
      %p54 = por %p52, %p53
      %p55 = scmp.ne.s32.totalorder %s41, %s42
      %p56 = scmp.eq.s32.totalorder %s20, 3
      %p57 = por %p55, %p56
      %p59 = scmp.ne.s32.totalorder %s42, %s58
      %p60 = scmp.eq.s32.totalorder %s20, 0
      %p61 = por %p59, %p60
      %s63 = sadd.s32 %s62, 1
      %p66 = scmp.eq.s32.totalorder %s14, 3
      %p67 = scmp.ne.s32.totalorder %s62, %s64
      %p68 = scmp.eq.s32.totalorder %s14, 0
      %p69 = por %p67, %p68
      %p70 = scmp.ne.s32.totalorder %s62, %s64
      %p71 = scmp.eq.s32.totalorder %s19, 3
      %p72 = por %p70, %p71
      %p73 = scmp.ne.s32.totalorder %s64, %s65
      %p74 = scmp.eq.s32.totalorder %s19, 0
      %p75 = por %p73, %p74
      %p76 = scmp.ne.s32.totalorder %s64, %s65
      %p77 = scmp.eq.s32.totalorder %s20, 3
      %p78 = por %p76, %p77
      %p80 = scmp.ne.s32.totalorder %s65, %s79
      %p81 = scmp.eq.s32.totalorder %s20, 0
      %p82 = por %p80, %p81
      %s84 = sadd.s32 %s83, 1
      %p87 = scmp.eq.s32.totalorder %s14, 3
      %p88 = scmp.ne.s32.totalorder %s83, %s85
      %p89 = scmp.eq.s32.totalorder %s14, 0
      %p90 = por %p88, %p89
      %p91 = scmp.ne.s32.totalorder %s83, %s85
      %p92 = scmp.eq.s32.totalorder %s19, 3
      %p93 = por %p91, %p92
      %p94 = scmp.ne.s32.totalorder %s85, %s86
      %p95 = scmp.eq.s32.totalorder %s19, 0
      %p96 = por %p94, %p95
      %p97 = scmp.ne.s32.totalorder %s85, %s86
      %p98 = scmp.eq.s32.totalorder %s20, 3
      %p99 = por %p97, %p98
      %p101 = scmp.ne.s32.totalorder %s86, %s100
      %p102 = scmp.eq.s32.totalorder %s20, 0
      %p103 = por %p101, %p102
      %s105 = sadd.s32 %s104, 1
      %p108 = scmp.eq.s32.totalorder %s14, 3
      %p109 = scmp.ne.s32.totalorder %s104, %s106
      %p110 = scmp.eq.s32.totalorder %s14, 0
      %p111 = por %p109, %p110
      %p112 = scmp.ne.s32.totalorder %s104, %s106
      %p113 = scmp.eq.s32.totalorder %s19, 3
      %p114 = por %p112, %p113
      %p115 = scmp.ne.s32.totalorder %s106, %s107
      %p116 = scmp.eq.s32.totalorder %s19, 0
      %p117 = por %p115, %p116
      %p118 = scmp.ne.s32.totalorder %s106, %s107
      %p119 = scmp.eq.s32.totalorder %s20, 3
      %p120 = por %p118, %p119
      %p122 = scmp.ne.s32.totalorder %s107, %s121
      %p123 = scmp.eq.s32.totalorder %s20, 0
      %p124 = por %p122, %p123
      %s126 = sadd.s32 %s125, 1
      %p129 = scmp.eq.s32.totalorder %s14, 3
      %p130 = scmp.ne.s32.totalorder %s125, %s127
      %p131 = scmp.eq.s32.totalorder %s14, 0
      %p132 = por %p130, %p131
      %p133 = scmp.ne.s32.totalorder %s125, %s127
      %p134 = scmp.eq.s32.totalorder %s19, 3
      %p135 = por %p133, %p134
      %p136 = scmp.ne.s32.totalorder %s127, %s128
      %p137 = scmp.eq.s32.totalorder %s19, 0
      %p138 = por %p136, %p137
      %p139 = scmp.ne.s32.totalorder %s127, %s128
      %p140 = scmp.eq.s32.totalorder %s20, 3
      %p141 = por %p139, %p140
      %p143 = scmp.ne.s32.totalorder %s128, %s142
      %p144 = scmp.eq.s32.totalorder %s20, 0
      %p145 = por %p143, %p144
      %s146 = ssub.s32 %s21, %s33
      %p147 = scmp.eq.s32.totalorder %s146, 0
      %s149 = sadd.s32 %s148, 1
      %s150 = scalar_select %p147, %s148, %s149
      %p153 = pneg %p147
      %p154 = scmp.eq.s32.totalorder %s14, 3
      %p155 = por %p153, %p154
      %p156 = scmp.ne.s32.totalorder %s148, %s151
      %p157 = scmp.eq.s32.totalorder %s14, 0
      %p158 = por %p156, %p157
      %p159 = scmp.ne.s32.totalorder %s148, %s151
      %p160 = scmp.eq.s32.totalorder %s19, 3
      %p161 = por %p159, %p160
      %p162 = scmp.ne.s32.totalorder %s151, %s152
      %p163 = scmp.eq.s32.totalorder %s19, 0
      %p164 = por %p162, %p163
      %p165 = scmp.ne.s32.totalorder %s151, %s152
      %p166 = scmp.eq.s32.totalorder %s20, 3
      %p167 = por %p165, %p166
      %p169 = scmp.ne.s32.totalorder %s152, %s168
      %p170 = scmp.eq.s32.totalorder %s20, 0
      %p171 = por %p169, %p170
      %p172 = scmp.le.s32.totalorder 1, %s14
      %p173 = scmp.lt.s32.totalorder %s14, 5
      %p174 = pnand %p172, %p173
      %p175 = pneg %p174
      // Predicated region
      $region9: #{tpu_custom_call.1} parent=5 // pred_check
        _
      $region10: #{tpu_custom_call.1} parent=5 // pred_check_branch
        %177 = sbr.rel (%p174) target = $region12
      $region11: #{tpu_custom_call.1} parent=5 // pred_region
        %s178 = ssub.s32 %s14, 1
        // Predicated region
        $region13: #{tpu_custom_call.1} parent=11 // pred_check
          %p179 = pneg %p75
        $region14: #{tpu_custom_call.1} parent=11 // pred_check_branch
          %181 = sbr.rel (%p179) target = $region16
        $region15: #{tpu_custom_call.1} parent=11 // pred_region
          _
        $region16: #{tpu_custom_call.1} parent=11 // pred_fallthru
          _
        // Predicated region
        $region17: #{tpu_custom_call.1} parent=11 // pred_check
          %p182 = pneg %p96
        $region18: #{tpu_custom_call.1} parent=11 // pred_check_branch
          %184 = sbr.rel (%p182) target = $region20
        $region19: #{tpu_custom_call.1} parent=11 // pred_region
          _
        $region20: #{tpu_custom_call.1} parent=11 // pred_fallthru
          _
        // Predicated region
        $region21: #{tpu_custom_call.1} parent=11 // pred_check
          %p185 = pneg %p117
        $region22: #{tpu_custom_call.1} parent=11 // pred_check_branch
          %187 = sbr.rel (%p185) target = $region24
        $region23: #{tpu_custom_call.1} parent=11 // pred_region
          _
        $region24: #{tpu_custom_call.1} parent=11 // pred_fallthru
          _
        // Predicated region
        $region25: #{tpu_custom_call.1} parent=11 // pred_check
          %p188 = pneg %p138
        $region26: #{tpu_custom_call.1} parent=11 // pred_check_branch
          %190 = sbr.rel (%p188) target = $region28
        $region27: #{tpu_custom_call.1} parent=11 // pred_region
          _
        $region28: #{tpu_custom_call.1} parent=11 // pred_fallthru
          _
      $region12: #{tpu_custom_call.1} parent=5 // pred_fallthru
        _
      %p191 = scmp.lt.s32.totalorder %s14, 4
      // Predicated region
      $region29: #{tpu_custom_call.1} parent=5 // pred_check
        %p192 = pneg %p191
      $region30: #{tpu_custom_call.1} parent=5 // pred_check_branch
        %194 = sbr.rel (%p192) target = $region32
      $region31: #{tpu_custom_call.1} parent=5 // pred_region
        // Predicated region
        $region33: #{tpu_custom_call.1} parent=31 // pred_check
          %p195 = pneg %p48
        $region34: #{tpu_custom_call.1} parent=31 // pred_check_branch
          %197 = sbr.rel (%p195) target = $region36
        $region35: #{tpu_custom_call.1} parent=31 // pred_region
          %s198 = sand.u32 %s38, 1
          %s199 = scalar_lea.sflag [#allocation4], %s198
          %s200 = sand.u32 %s38, 1
          %s201 = smul.addr %s200, 16
          %s202 = scalar_lea.vmem [#allocation3], %s201
          %s204 = ssub.s32 256, 256
          %205 = vsyncadd %s199, %s204
          %s206 = smul.addr %s21, 4
          %s207 = sadd.s32 %s22, %s206
          %s208 = smul.addr %s207, 128
          %s209 = scalar_lea.hbm %s0, %s208
          %s210 = sshll.u32 %s202, 4
          %s211 = int_to_ptr.vmem [resolvable:$true] %s210
          %216 = dma.hbm_to_vmem [thread:$0]  %s209, 256, %s211, %s199, 256, 128, 8
        $region36: #{tpu_custom_call.1} parent=31 // pred_fallthru
          _
      $region32: #{tpu_custom_call.1} parent=5 // pred_fallthru
        _
      %p217 = scmp.le.s32.totalorder 1, %s14
      %p218 = scmp.lt.s32.totalorder %s14, 5
      %p219 = pnand %p217, %p218
      %p220 = pneg %p219
      // Predicated region
      $region37: #{tpu_custom_call.1} parent=5 // pred_check
        _
      $region38: #{tpu_custom_call.1} parent=5 // pred_check_branch
        %222 = sbr.rel (%p219) target = $region40
      $region39: #{tpu_custom_call.1} parent=5 // pred_region
        %s223 = ssub.s32 %s14, 1
        %s224 = sand.u32 %s41, 1
        %s225 = scalar_lea.sflag [#allocation4], %s224
        %s226 = sand.u32 %s41, 1
        %s227 = smul.addr %s226, 16
        %s228 = scalar_lea.vmem [#allocation3], %s227
        // Predicated region
        $region41: #{tpu_custom_call.1} parent=39 // pred_check
          %p229 = pneg %p54
        $region42: #{tpu_custom_call.1} parent=39 // pred_check_branch
          %231 = sbr.rel (%p229) target = $region44
        $region43: #{tpu_custom_call.1} parent=39 // pred_region
          %232 = dma.done %s225, 256
        $region44: #{tpu_custom_call.1} parent=39 // pred_fallthru
          _
        %s233 = sand.u32 %s41, 1
        %s234 = scalar_lea.sflag [#allocation4], %s233
        %s235 = sand.u32 %s41, 1
        %s236 = smul.addr %s235, 16
        %s237 = scalar_lea.vmem [#allocation3], %s236
        %p238 = pneg %p54
        %p239 = pneg %p51
        %p240 = pneg %p75
        %p241 = pneg %p72
        %p242 = pneg %p96
        %p243 = pneg %p93
        %p244 = pneg %p117
        %p245 = pneg %p114
        %p246 = pneg %p138
        %p247 = pneg %p135
        %p248 = pneg %p164
        %p249 = pneg %p161
        %p250 = scmp.lt.s32.totalorder %s23, 1
        %s251 = scalar_select %p250, %s23, 1
        %s252 = smul.addr %s251, 2
        %s253 = smul.addr %s252, 8
        %s254 = scalar_lea.vmem %s5, %s253
        %p255 = scmp.lt.s32.totalorder %s23, 1
        %s256 = scalar_select %p255, %s23, 1
        %s257 = smul.addr %s256, 2
        %s258 = smul.addr %s257, 8
        %s259 = scalar_lea.vmem %s5, %s258
        %p260 = scmp.eq.s32.totalorder %s24, 0
        // Predicated region
        $region45: #{tpu_custom_call.1} parent=39 // pred_check
          %p261 = pneg %p260
        $region46: #{tpu_custom_call.1} parent=39 // pred_check_branch
          %263 = sbr.rel (%p261) target = $region48
        $region47: #{tpu_custom_call.1} parent=39 // pred_region
          %vm264 = vcmask 7168
          %265 = vst.msk [vmem:[#allocation2] sm:$0xff] %vm264, 0.0
          %266 = vst.msk [vmem:[#allocation2 + $0x8] sm:$0xff] %vm264, 0.0
        $region48: #{tpu_custom_call.1} parent=39 // pred_fallthru
          _
        %v267 = vld [vmem:[%s228] sm:$0xff]
        %v268 = vld [vmem:[%s228 + $0x8] sm:$0xff]
        %v269 = vld [vmem:[#allocation2] sm:$0xff]
        %v270 = vld [vmem:[#allocation2 + $0x8] sm:$0xff]
        %271 = vadd.xlane.f32.xlu0 %v267
        %v272 = vpop.xlane.xlu0 %271
        %273 = vadd.xlane.f32.xlu0 %v268
        %v274 = vpop.xlane.xlu0 %273
        %v275 = vadd.f32 %v269, %v272
        %v276 = vadd.f32 %v270, %v274
        %vm277 = vcmask 7168
        %278 = vst.msk [vmem:[#allocation2] sm:$0xff] %vm277, %v275
        %279 = vst.msk [vmem:[#allocation2 + $0x8] sm:$0xff] %vm277, %v276
        %p280 = scmp.eq.s32.totalorder %s24, 1
        // Predicated region
        $region49: #{tpu_custom_call.1} parent=39 // pred_check
          %p281 = pneg %p280
        $region50: #{tpu_custom_call.1} parent=39 // pred_check_branch
          %283 = sbr.rel (%p281) target = $region52
        $region51: #{tpu_custom_call.1} parent=39 // pred_region
          %v284 = vld [vmem:[#allocation2] sm:$0xff]
          %v285 = vld [vmem:[#allocation2 + $0x8] sm:$0xff]
          %v286 = vmul.f32 %v284, 0.00390625
          %v287 = vmul.f32 %v285, 0.00390625
          %v288 = vld [vmem:[%s1] sm:$0xff]
          %v289 = vld [vmem:[%s1 + $0x8] sm:$0xff]
          %291 = vset.pattern.permute.xlu0 0
          %292 = vperm.xlu0 %291, %v286
          %v293 = vpop.permute.xlu0 %292
          %296 = vset.pattern.permute.xlu0 0
          %297 = vperm.xlu0 %296, %v287
          %v298 = vpop.permute.xlu0 %297
          %v300 = vmul.f32 %v288, %v293
          %v301 = vmul.f32 %v289, %v298
          %vm302 = vcmask 15360
          %v303 = vsel %vm302, %v300, 0.0
          %v304 = vsel %vm302, %v301, 0.0
          %v305 = vadd.f32 %v303, %v304
          %v306 = vrot.slane %v305, 4
          %v307 = vadd.f32 %v305, %v306
          %v308 = vrot.slane %v307, 2
          %v309 = vadd.f32 %v307, %v308
          %v310 = vrot.slane %v309, 1
          %v311 = vadd.f32 %v309, %v310
          %v312 = vld [vmem:[%s2] sm:$0x1]
          %v313 = vadd.f32 %v311, %v312
          %v314 = vmax.f32 %v313, 0.0
          %v315 = vld [vmem:[%s3] sm:$0xff]
          %v316 = vld [vmem:[%s3 + $0x8] sm:$0xff]
          %v317 = vlaneseq
          %v318 = vshrl.u32 %v317, 7
          %v319 = vsub.s32 0, %v318
          %v320 = vrot.slane %v314, %v319
          %v321 = vmul.f32 %v315, %v320
          %v322 = vmul.f32 %v316, %v320
          %v323 = vsel %vm302, %v321, 0.0
          %324 = vadd.xlane.f32.xlu0 %v323
          %v325 = vpop.xlane.xlu0 %324
          %v326 = vsel %vm302, %v322, 0.0
          %327 = vadd.xlane.f32.xlu0 %v326
          %v328 = vpop.xlane.xlu0 %327
          %v329 = vld [vmem:[%s4] sm:$0xff]
          %v330 = vld [vmem:[%s4 + $0x8] sm:$0xff]
          %v331 = vadd.f32 %v325, %v329
          %v332 = vadd.f32 %v328, %v330
          %v333 = vxor.u32 %v331, 2147483648
          %v334 = vxor.u32 %v332, 2147483648
          %v335 = vmul.f32 %v333, 1.442695
          %v336 = vpow.pop %v335
          %v337 = vmul.f32 %v334, 1.442695
          %v338 = vpow.pop %v337
          %v339 = vadd.f32 %v336, 1.0
          %v340 = vadd.f32 %v338, 1.0
          %v341 = vrcp.pop %v339
          %v342 = vmul.f32 1.0, %v341
          %v343 = vrcp.pop %v340
          %v344 = vmul.f32 1.0, %v343
          %345 = vst.msk [vmem:[%s259] sm:$0xff] %vm277, %v342
          %346 = vst.msk [vmem:[%s259 + $0x8] sm:$0xff] %vm277, %v344
        $region52: #{tpu_custom_call.1} parent=39 // pred_fallthru
          _
        %p347 = scmp.lt.s32.totalorder %s23, 1
        %s348 = scalar_select %p347, %s23, 1
        %s349 = smul.addr %s348, 2
        %s350 = smul.addr %s349, 8
        %s351 = scalar_lea.vmem %s5, %s350
        // Predicated region
        $region53: #{tpu_custom_call.1} parent=39 // pred_check
          %p352 = pneg %p161
        $region54: #{tpu_custom_call.1} parent=39 // pred_check_branch
          %354 = sbr.rel (%p352) target = $region56
        $region55: #{tpu_custom_call.1} parent=39 // pred_region
          _
        $region56: #{tpu_custom_call.1} parent=39 // pred_fallthru
          _
      $region40: #{tpu_custom_call.1} parent=5 // pred_fallthru
        _
      %p355 = scmp.le.s32.totalorder 2, %s14
      // Predicated region
      $region57: #{tpu_custom_call.1} parent=5 // pred_check
        %p356 = pneg %p355
      $region58: #{tpu_custom_call.1} parent=5 // pred_check_branch
        %358 = sbr.rel (%p356) target = $region60
      $region59: #{tpu_custom_call.1} parent=5 // pred_region
        %s359 = ssub.s32 %s14, 2
        // Predicated region
        $region61: #{tpu_custom_call.1} parent=59 // pred_check
          %p360 = pneg %p167
        $region62: #{tpu_custom_call.1} parent=59 // pred_check_branch
          %362 = sbr.rel (%p360) target = $region64
        $region63: #{tpu_custom_call.1} parent=59 // pred_region
          %p363 = scmp.lt.s32.totalorder %s25, 1
          %s364 = scalar_select %p363, %s25, 1
          %s365 = smul.addr %s364, 2
          %s366 = smul.addr %s365, 8
          %s367 = scalar_lea.vmem %s5, %s366
        $region64: #{tpu_custom_call.1} parent=59 // pred_fallthru
          _
      $region60: #{tpu_custom_call.1} parent=5 // pred_fallthru
        _
    $region6: #{tpu_custom_call.1} parent=1 // loop_footer
      %s18 = sadd.s32 1, %s14
    $region7: #{tpu_custom_call.1} parent=1 // loop_footer_branch
      %13 = sbr.rel target = $region3
    $region8: #{tpu_custom_call.1} parent=1 // loop_exit
      _
    %368 = vsyncpa [#allocation4], 1
    %s369 = scalar_lea.sflag [#allocation4], 1
    %370 = vsyncpa %s369, 1

</llo_original>
